<compile_context>
chip_gen: v6e
topology: v6e:2x2x1
jax: 0.10.0
libtpu: 0.0.40
codegen_flags: <defaults>
</compile_context>

<pallas_src>
import functools

import jax
import jax.numpy as jnp
import numpy as np
from jax import lax
from jax.experimental import pallas as pl
from jax.experimental.pallas import tpu as pltpu

# ---- module config (matches the test instantiation) ----
IN_CHANNELS = 4
OUT_CHANNELS = 8
KERNEL_SIZE = 3
STRIDE = 1        # only stride=1 supported in this kernel
DILATION = 1


def _sep_conv_kernel(x_ref, w_ref, o_ref, *, n_batch):
    # x_ref: (N, KK*C, HW)   fused im2row operand, flat spatial on lanes
    # w_ref: (Cout, KK*C)    depthwise-folded-into-pointwise weights
    # o_ref: (N, Cout, HW)   lane-dense output (HW multiple of 128 -> unmasked vst)
    w = w_ref[...]
    for b in range(n_batch):                       # static, tiny (N=2): 2 MXU dots
        o_ref[b] = jnp.dot(w, x_ref[b],
                           preferred_element_type=jnp.float32).astype(o_ref.dtype)


def separable_conv2d(x_nchw, dw_weight, pw_weight, *, kernel_size=KERNEL_SIZE,
                     dilation=DILATION):
    """x_nchw: (N, C, H, W); dw_weight: (C, 1, K, K); pw_weight: (Cout, C, 1, 1)."""
    n, c, h, w = x_nchw.shape
    cout = pw_weight.shape[0]
    k = kernel_size
    kk = k * k
    kkc = kk * c

    # fixed_padding (pure data movement, done in the wrapper)
    k_eff = k + (k - 1) * (dilation - 1)
    pad_total = k_eff - 1
    pad_beg = pad_total // 2
    pad_end = pad_total - pad_beg

    x_pad = jnp.pad(x_nchw, ((0, 0), (0, 0), (pad_beg, pad_end), (pad_beg, pad_end)))
    hp, wp = h + pad_total, w + pad_total
    ho = hp - (k - 1) * dilation          # stride = 1
    wo = wp - (k - 1) * dilation
    hw = ho * wo

    # im2row: K*K shifted windows, flattened spatial last (lane-dense), then the
    # taps folded onto the contraction dim (row-major index = t*C + c).
    # Layout plumbing only — all FLOPs stay in the kernel.
    taps = []
    for kh in range(k):
        for kw in range(k):
            win = x_pad[:, :,
                        kh * dilation:kh * dilation + ho,
                        kw * dilation:kw * dilation + wo]          # (N, C, Ho, Wo)
            taps.append(win.reshape(n, c, hw))
    x_taps = jnp.stack(taps, axis=1).reshape(n, kkc, hw)           # (N, KK*C, HW)

    # Fused weights: W[co, t*C + c] = pw[co, c] * dw[t, c]  with t = kh*K + kw.
    dw_flat = dw_weight[:, 0, :, :].reshape(c, kk).T               # (KK, C)
    pw_flat = pw_weight[:, :, 0, 0]                                # (Cout, C)
    w_fused = (pw_flat[:, None, :] * dw_flat[None, :, :]).reshape(cout, kkc)

    kernel = functools.partial(_sep_conv_kernel, n_batch=n)

    out_flat = pl.pallas_call(
        kernel,
        out_shape=jax.ShapeDtypeStruct((n, cout, hw), x_nchw.dtype),
        grid_spec=pltpu.PrefetchScalarGridSpec(
            num_scalar_prefetch=0,
            grid=(1,),                                             # single step: whole batch resident
            in_specs=[
                pl.BlockSpec((n, kkc, hw), lambda i: (0, 0, 0)),
                pl.BlockSpec((cout, kkc), lambda i: (0, 0)),
            ],
            out_specs=pl.BlockSpec((n, cout, hw), lambda i: (0, 0, 0)),
        ),
        compiler_params=pltpu.CompilerParams(
            dimension_semantics=("arbitrary",)),
    )(x_taps, w_fused)

    # NCHW output: pure reshape (row-major contiguous), no transpose needed.
    return out_flat.reshape(n, cout, ho, wo)


def _reference(x_nchw, dw_weight, pw_weight, *, kernel_size=KERNEL_SIZE,
               dilation=DILATION):
    """Pure-JAX reference (lax conv) mirroring the PyTorch forward."""
    k = kernel_size
    k_eff = k + (k - 1) * (dilation - 1)
    pad_total = k_eff - 1
    pad_beg = pad_total // 2
    pad_end = pad_total - pad_beg
    x = jnp.transpose(x_nchw, (0, 2, 3, 1))
    x = jnp.pad(x, ((0, 0), (pad_beg, pad_end), (pad_beg, pad_end), (0, 0)))
    c = x.shape[-1]
    dw_rhs = jnp.transpose(dw_weight, (2, 3, 1, 0))                 # (K, K, 1, C)
    y = lax.conv_general_dilated(
        x, dw_rhs, window_strides=(1, 1), padding="VALID",
        rhs_dilation=(dilation, dilation),
        dimension_numbers=("NHWC", "HWIO", "NHWC"),
        feature_group_count=c)
    pw_rhs = jnp.transpose(pw_weight, (2, 3, 1, 0))                 # (1, 1, C, Cout)
    y = lax.conv_general_dilated(
        y, pw_rhs, window_strides=(1, 1), padding="VALID",
        dimension_numbers=("NHWC", "HWIO", "NHWC"))
    return jnp.transpose(y, (0, 3, 1, 2))


if __name__ == "__main__":
    key = jax.random.PRNGKey(0)
    kx, kdw, kpw = jax.random.split(key, 3)

    x = jax.random.normal(kx, (2, IN_CHANNELS, 16, 16), dtype=jnp.float32)
    # PyTorch parameter shapes: conv1.weight (C, 1, K, K), pointwise.weight (Cout, C, 1, 1)
    dw_weight = jax.random.normal(kdw, (IN_CHANNELS, 1, KERNEL_SIZE, KERNEL_SIZE),
                                  dtype=jnp.float32) * 0.1
    pw_weight = jax.random.normal(kpw, (OUT_CHANNELS, IN_CHANNELS, 1, 1),
                                  dtype=jnp.float32) * 0.1

    out = separable_conv2d(x, dw_weight, pw_weight)
    out = jax.block_until_ready(out)

    ref = jax.block_until_ready(_reference(x, dw_weight, pw_weight))
    np.testing.assert_allclose(np.asarray(out), np.asarray(ref), rtol=1e-5, atol=1e-5)

    print("KERNEL_OK")
</pallas_src>

<mosaic_0001>
module attributes {stable_mosaic.version = 11 : i64} {
  func.func @_sep_conv_kernel(%arg0: i32, %arg1: memref<2x36x256xf32, #tpu.memory_space<vmem>>, %arg2: memref<8x36xf32, #tpu.memory_space<vmem>>, %arg3: memref<2x8x256xf32, #tpu.memory_space<vmem>>) attributes {dimension_semantics = [#tpu.dimension_semantics<arbitrary>], iteration_bounds = array<i64: 1>, scalar_prefetch = 0 : i64, scratch_operands = 0 : i64, tpu.core_type = #tpu.core_type<tc>, window_params = [{pipeline_mode = #tpu.pipeline_mode<synchronous>, transform_indices = @transform_0, window_bounds = array<i64: 2, 36, 256>}, {pipeline_mode = #tpu.pipeline_mode<synchronous>, transform_indices = @transform_1, window_bounds = array<i64: 8, 36>}, {pipeline_mode = #tpu.pipeline_mode<synchronous>, transform_indices = @transform_2, window_bounds = array<i64: 2, 8, 256>}]} {
    %c0 = arith.constant 0 : index
    %c0_0 = arith.constant 0 : index
    %0 = vector.load %arg2[%c0, %c0_0] : memref<8x36xf32, #tpu.memory_space<vmem>>, vector<8x36xf32>
    %c0_1 = arith.constant 0 : index
    %c0_2 = arith.constant 0 : index
    %c0_3 = arith.constant 0 : index
    %1 = vector.load %arg1[%c0_1, %c0_2, %c0_3] : memref<2x36x256xf32, #tpu.memory_space<vmem>>, vector<1x36x256xf32>
    %2 = vector.shape_cast %1 : vector<1x36x256xf32> to vector<36x256xf32>
    %cst = arith.constant dense<0.000000e+00> : vector<8x256xf32>
    %3 = tpu.matmul %0, %2, %cst {dimension_numbers = #tpu.dot_dimension_numbers<[1], [0], [0], [1], [0, 0, 1, 1], [], []>} : vector<8x36xf32>, vector<36x256xf32>, vector<8x256xf32> -> vector<8x256xf32>
    %c0_4 = arith.constant 0 : index
    %c0_5 = arith.constant 0 : index
    %c0_6 = arith.constant 0 : index
    %4 = vector.load %arg3[%c0_4, %c0_5, %c0_6] : memref<2x8x256xf32, #tpu.memory_space<vmem>>, vector<1x8x256xf32>
    %5 = vector.shape_cast %4 : vector<1x8x256xf32> to vector<8x256xf32>
    %6 = vector.shape_cast %3 : vector<8x256xf32> to vector<1x8x256xf32>
    tpu.vector_store %arg3[%c0_4, %c0_5, %c0_6], %6 {strides = array<i32>} : memref<2x8x256xf32, #tpu.memory_space<vmem>>, vector<1x8x256xf32>,
    %c1 = arith.constant 1 : index
    %c0_7 = arith.constant 0 : index
    %c0_8 = arith.constant 0 : index
    %7 = vector.load %arg1[%c1, %c0_7, %c0_8] : memref<2x36x256xf32, #tpu.memory_space<vmem>>, vector<1x36x256xf32>
    %8 = vector.shape_cast %7 : vector<1x36x256xf32> to vector<36x256xf32>
    %cst_9 = arith.constant dense<0.000000e+00> : vector<8x256xf32>
    %9 = tpu.matmul %0, %8, %cst_9 {dimension_numbers = #tpu.dot_dimension_numbers<[1], [0], [0], [1], [0, 0, 1, 1], [], []>} : vector<8x36xf32>, vector<36x256xf32>, vector<8x256xf32> -> vector<8x256xf32>
    %c1_10 = arith.constant 1 : index
    %c0_11 = arith.constant 0 : index
    %c0_12 = arith.constant 0 : index
    %10 = vector.load %arg3[%c1_10, %c0_11, %c0_12] : memref<2x8x256xf32, #tpu.memory_space<vmem>>, vector<1x8x256xf32>
    %11 = vector.shape_cast %10 : vector<1x8x256xf32> to vector<8x256xf32>
    %12 = vector.shape_cast %9 : vector<8x256xf32> to vector<1x8x256xf32>
    tpu.vector_store %arg3[%c1_10, %c0_11, %c0_12], %12 {strides = array<i32>} : memref<2x8x256xf32, #tpu.memory_space<vmem>>, vector<1x8x256xf32>,
    return
  }
  func.func @transform_0(%arg0: i32) -> (i32, i32, i32) {
    %c0_i32 = arith.constant 0 : i32
    %c0_i32_0 = arith.constant 0 : i32
    %c0_i32_1 = arith.constant 0 : i32
    %c0_i32_2 = arith.constant 0 : i32
    return %c0_i32, %c0_i32_0, %c0_i32_1 : i32, i32, i32
  }
  func.func @transform_1(%arg0: i32) -> (i32, i32) {
    %c0_i32 = arith.constant 0 : i32
    %c0_i32_0 = arith.constant 0 : i32
    %c0_i32_1 = arith.constant 0 : i32
    return %c0_i32, %c0_i32_0 : i32, i32
  }
  func.func @transform_2(%arg0: i32) -> (i32, i32, i32) {
    %c0_i32 = arith.constant 0 : i32
    %c0_i32_0 = arith.constant 0 : i32
    %c0_i32_1 = arith.constant 0 : i32
    %c0_i32_2 = arith.constant 0 : i32
    return %c0_i32, %c0_i32_0, %c0_i32_1 : i32, i32, i32
  }
}

</mosaic_0001>

<llo_original>
// kernel: tpu_custom_call.1
$region0: #{tpu_custom_call.1}
  #allocation0 [shape = 'u32[]', space=smem, size = 0x4, offset = 0x4, fixed_abs, tag = 'smem constant byte address 0x4 - core index']
  #allocation1 [shape = 'u32[144,128]{1,0:T(1,128)}', space=vmem, size = 0x12000, scoped, tag = 'internal scratch']
  %s0 = inlined_call_operand.vmem [shape: f32[2,36,256], index: 0, kind: input, shape index: {}]
  %s1 = inlined_call_operand.vmem [shape: f32[8,36], index: 1, kind: input, shape index: {}]
  %s2 = inlined_call_operand.hbm [shape: f32[2,8,256], index: 2, kind: output, shape index: {}]
  %s3 = sld [smem:[#allocation0]]
  $region18: #{tpu_custom_call.1} parent=0
    _
  %s5 = ssub.s32 1, %s3
  %s6 = scalar_select 0, %s5, %s3
  $region1: #{tpu_custom_call.1} parent=0
    #allocation2 [shape = 'u8[16384]{0}', space=vmem, size = 0x4000, scoped, tag = 'output window, operand 0, single buffered']
    #allocation3 [shape = 's32[1]{0}', space=sflag, size = 0x4, scoped, tag = 'scoped memory for tpu_custom_call.1']
    %7 = vsyncpa [#allocation3], 0
    // Predicated region
    $region2: #{tpu_custom_call.1} parent=1 // pred_check
      _
    $region3: #{tpu_custom_call.1} parent=1 // pred_check_branch
      %9 = sbr.rel (0) target = $region5
    $region4: #{tpu_custom_call.1} parent=1 // pred_region
      _
    $region5: #{tpu_custom_call.1} parent=1 // pred_fallthru
      _
    // Predicated region
    $region6: #{tpu_custom_call.1} parent=1 // pred_check
      _
    $region7: #{tpu_custom_call.1} parent=1 // pred_check_branch
      %11 = sbr.rel (0) target = $region9
    $region8: #{tpu_custom_call.1} parent=1 // pred_region
      _
    $region9: #{tpu_custom_call.1} parent=1 // pred_fallthru
      _
    %v12 = vld [vmem:[%s1] sm:$0xff]
    %v13 = vld [vmem:[%s0] sm:$0xff]
    %v14 = vld [vmem:[%s0 + $0x8] sm:$0xff]
    %v15 = vld [vmem:[%s0 + $0x10] sm:$0xff]
    %v16 = vld [vmem:[%s0 + $0x18] sm:$0xff]
    %v17 = vld [vmem:[%s0 + $0x20] sm:$0xff]
    %v18 = vld [vmem:[%s0 + $0x28] sm:$0xff]
    %v19 = vld [vmem:[%s0 + $0x30] sm:$0xff]
    %v20 = vld [vmem:[%s0 + $0x38] sm:$0xff]
    %v21 = vld [vmem:[%s0 + $0x40] sm:$0xf]
    %v22 = vld [vmem:[%s0 + $0x48] sm:$0xf]
    %vm23 = vcmask 293888
    %v25 = vsel %vm23, %v12, 0
    %vm27 = vcmask 1043456
    %v29 = vsel %vm27, %v21, 0
    %v32 = vsel %vm27, %v22, 0
    %34 = vmatprep.subr.mxu0 0.0
    %35 = vmatpush1.msra.mxu0 0.0
    %36 = vmatprep.subr.mxu0 0.0
    %37 = vmatpush1.msra.mxu0 0.0
    %38 = vmatprep.subr.mxu0 0.0
    %39 = vmatpush1.msra.mxu0 0.0
    %40 = vmatprep.subr.mxu0 0.0
    %41 = vmatpush1.msra.mxu0 0.0
    %42 = vmatprep.subr.mxu0 0.0
    %43 = vmatpush1.msra.mxu0 0.0
    %44 = vmatprep.subr.mxu0 0.0
    %45 = vmatpush1.msra.mxu0 0.0
    %46 = vmatprep.subr.mxu0 0.0
    %47 = vmatpush1.msra.mxu0 0.0
    %48 = vmatprep.subr.mxu0 0.0
    %49 = vmatpush1.msra.mxu0 0.0
    %50 = vmatprep.subr.mxu0 0.0
    %51 = vmatpush1.msra.mxu0 0.0
    %52 = vmatprep.subr.mxu0 0.0
    %53 = vmatpush1.msra.mxu0 0.0
    %54 = vmatprep.subr.mxu0 0.0
    %55 = vmatpush1.msra.mxu0 0.0
    %56 = vmatprep.subr.mxu0 %v32
    %57 = vmatpush1.msra.mxu0 %v29
    %58 = vmatprep.subr.mxu0 %v20
    %59 = vmatpush1.msra.mxu0 %v19
    %60 = vmatprep.subr.mxu0 %v18
    %61 = vmatpush1.msra.mxu0 %v17
    %62 = vmatprep.subr.mxu0 %v16
    %63 = vmatpush1.msra.mxu0 %v15
    %64 = vmatprep.subr.mxu0 %v14
    %65 = vmatpush1.msra.mxu0 %v13
    %66 = vmatprep.subr.mxu0 0.0
    %67 = vmatpush2.msra.mxu0 0.0
    %68 = vmatprep.subr.mxu0 0.0
    %69 = vmatpush2.msra.mxu0 0.0
    %70 = vmatprep.subr.mxu0 0.0
    %71 = vmatpush2.msra.mxu0 0.0
    %72 = vmatprep.subr.mxu0 0.0
    %73 = vmatpush2.msra.mxu0 0.0
    %74 = vmatprep.subr.mxu0 0.0
    %75 = vmatpush2.msra.mxu0 0.0
    %76 = vmatprep.subr.mxu0 0.0
    %77 = vmatpush2.msra.mxu0 0.0
    %78 = vmatprep.subr.mxu0 0.0
    %79 = vmatpush2.msra.mxu0 0.0
    %80 = vmatprep.subr.mxu0 0.0
    %81 = vmatpush2.msra.mxu0 0.0
    %82 = vmatprep.subr.mxu0 0.0
    %83 = vmatpush2.msra.mxu0 0.0
    %84 = vmatprep.subr.mxu0 0.0
    %85 = vmatpush2.msra.mxu0 0.0
    %86 = vmatprep.subr.mxu0 0.0
    %87 = vmatpush2.msra.mxu0 0.0
    %88 = vmatprep.subr.mxu0 0.0
    %89 = vmatpush2.msra.mxu0 0.0
    %90 = vmatprep.subr.mxu0 0.0
    %91 = vmatpush2.msra.mxu0 0.0
    %92 = vmatprep.subr.mxu0 0.0
    %93 = vmatpush2.msra.mxu0 0.0
    %94 = vmatprep.subr.mxu0 0.0
    %95 = vmatpush2.msra.mxu0 0.0
    %96 = vmatprep.subr.mxu0 0.0
    %97 = vmatpush2.msra.mxu0 0.0
    %98 = vmatprep.mubr.f32.mxu0 0.0
    %99 = vmatmul.mubr.f32.gmra.mxu0 %v25
    %v100 = vpop.f32.mrf.mxu0
    %v101 = vadd.f32 0.0, %v100
    %v102 = vpop.f32.mrf.mxu0
    %v103 = vadd.f32 0.0, %v102
    %104 = vdwg.mxu0
    %105 = vst [vmem:[#allocation2] sm:$0xff] %v101
    %106 = vst [vmem:[#allocation2 + $0x8] sm:$0xff] %v103
    %s107 = scalar_lea.vmem %s0, 80
    %v108 = vld [vmem:[%s107] sm:$0xff]
    %v109 = vld [vmem:[%s107 + $0x8] sm:$0xff]
    %v110 = vld [vmem:[%s107 + $0x10] sm:$0xff]
    %v111 = vld [vmem:[%s107 + $0x18] sm:$0xff]
    %v112 = vld [vmem:[%s107 + $0x20] sm:$0xff]
    %v113 = vld [vmem:[%s107 + $0x28] sm:$0xff]
    %v114 = vld [vmem:[%s107 + $0x30] sm:$0xff]
    %v115 = vld [vmem:[%s107 + $0x38] sm:$0xff]
    %v116 = vld [vmem:[%s107 + $0x40] sm:$0xf]
    %v117 = vld [vmem:[%s107 + $0x48] sm:$0xf]
    %v119 = vsel %vm27, %v116, 0
    %v122 = vsel %vm27, %v117, 0
    %124 = vmatprep.subr.mxu0 0.0
    %125 = vmatpush1.msra.mxu0 0.0
    %126 = vmatprep.subr.mxu0 0.0
    %127 = vmatpush1.msra.mxu0 0.0
    %128 = vmatprep.subr.mxu0 0.0
    %129 = vmatpush1.msra.mxu0 0.0
    %130 = vmatprep.subr.mxu0 0.0
    %131 = vmatpush1.msra.mxu0 0.0
    %132 = vmatprep.subr.mxu0 0.0
    %133 = vmatpush1.msra.mxu0 0.0
    %134 = vmatprep.subr.mxu0 0.0
    %135 = vmatpush1.msra.mxu0 0.0
    %136 = vmatprep.subr.mxu0 0.0
    %137 = vmatpush1.msra.mxu0 0.0
    %138 = vmatprep.subr.mxu0 0.0
    %139 = vmatpush1.msra.mxu0 0.0
    %140 = vmatprep.subr.mxu0 0.0
    %141 = vmatpush1.msra.mxu0 0.0
    %142 = vmatprep.subr.mxu0 0.0
    %143 = vmatpush1.msra.mxu0 0.0
    %144 = vmatprep.subr.mxu0 0.0
    %145 = vmatpush1.msra.mxu0 0.0
    %146 = vmatprep.subr.mxu0 %v122
    %147 = vmatpush1.msra.mxu0 %v119
    %148 = vmatprep.subr.mxu0 %v115
    %149 = vmatpush1.msra.mxu0 %v114
    %150 = vmatprep.subr.mxu0 %v113
    %151 = vmatpush1.msra.mxu0 %v112
    %152 = vmatprep.subr.mxu0 %v111
    %153 = vmatpush1.msra.mxu0 %v110
    %154 = vmatprep.subr.mxu0 %v109
    %155 = vmatpush1.msra.mxu0 %v108
    %156 = vmatprep.subr.mxu0 0.0
    %157 = vmatpush2.msra.mxu0 0.0
    %158 = vmatprep.subr.mxu0 0.0
    %159 = vmatpush2.msra.mxu0 0.0
    %160 = vmatprep.subr.mxu0 0.0
    %161 = vmatpush2.msra.mxu0 0.0
    %162 = vmatprep.subr.mxu0 0.0
    %163 = vmatpush2.msra.mxu0 0.0
    %164 = vmatprep.subr.mxu0 0.0
    %165 = vmatpush2.msra.mxu0 0.0
    %166 = vmatprep.subr.mxu0 0.0
    %167 = vmatpush2.msra.mxu0 0.0
    %168 = vmatprep.subr.mxu0 0.0
    %169 = vmatpush2.msra.mxu0 0.0
    %170 = vmatprep.subr.mxu0 0.0
    %171 = vmatpush2.msra.mxu0 0.0
    %172 = vmatprep.subr.mxu0 0.0
    %173 = vmatpush2.msra.mxu0 0.0
    %174 = vmatprep.subr.mxu0 0.0
    %175 = vmatpush2.msra.mxu0 0.0
    %176 = vmatprep.subr.mxu0 0.0
    %177 = vmatpush2.msra.mxu0 0.0
    %178 = vmatprep.subr.mxu0 0.0
    %179 = vmatpush2.msra.mxu0 0.0
    %180 = vmatprep.subr.mxu0 0.0
    %181 = vmatpush2.msra.mxu0 0.0
    %182 = vmatprep.subr.mxu0 0.0
    %183 = vmatpush2.msra.mxu0 0.0
    %184 = vmatprep.subr.mxu0 0.0
    %185 = vmatpush2.msra.mxu0 0.0
    %186 = vmatprep.subr.mxu0 0.0
    %187 = vmatpush2.msra.mxu0 0.0
    %188 = vmatprep.mubr.f32.mxu0 0.0
    %189 = vmatmul.mubr.f32.gmra.mxu0 %v25
    %v190 = vpop.f32.mrf.mxu0
    %v191 = vadd.f32 0.0, %v190
    %v192 = vpop.f32.mrf.mxu0
    %v193 = vadd.f32 0.0, %v192
    %194 = vdwg.mxu0
    %s195 = scalar_lea.vmem [#allocation2], 16
    %196 = vst [vmem:[%s195] sm:$0xff] %v191
    %197 = vst [vmem:[%s195 + $0x8] sm:$0xff] %v193
    // Predicated region
    $region10: #{tpu_custom_call.1} parent=1 // pred_check
      _
    $region11: #{tpu_custom_call.1} parent=1 // pred_check_branch
      %199 = sbr.rel (0) target = $region13
    $region12: #{tpu_custom_call.1} parent=1 // pred_region
      %s201 = ssub.s32 512, 512
      %202 = vsyncadd [#allocation3], %s201
      %s203 = sshll.u32 [#allocation2], 4
      %s204 = int_to_ptr.vmem [resolvable:$true] %s203
      %209 = dma.vmem_to_hbm [thread:$0]  %s204, 512, %s2, [#allocation3], 256, 256, 16
    $region13: #{tpu_custom_call.1} parent=1 // pred_fallthru
      _
    // Predicated region
    $region14: #{tpu_custom_call.1} parent=1 // pred_check
      _
    $region15: #{tpu_custom_call.1} parent=1 // pred_check_branch
      %211 = sbr.rel (0) target = $region17
    $region16: #{tpu_custom_call.1} parent=1 // pred_region
      %212 = dma.done [#allocation3], 512
    $region17: #{tpu_custom_call.1} parent=1 // pred_fallthru
      _
    %213 = vsyncpa [#allocation3], 1

</llo_original>
